<compile_context>
chip_gen: v5e
topology: v5e:2x2
jax: 0.10.0
libtpu: 0.0.40
codegen_flags: <defaults>
</compile_context>

<pallas_src>
import functools

import jax
import jax.numpy as jnp
from jax import lax
from jax.experimental import pallas as pl
from jax.experimental.pallas import tpu as pltpu


def _tile_pos_embed_kernel(rows_ref, nact_ref, x_hbm, emb_ref, o_hbm,
                           buf, in_sem, out_sem, *, n_tiles, tq):
    """One grid point = one (batch, token-block); manual DMA over active tiles.

    rows_ref : SMEM (B * n_tiles,) int32    -- embedding row per (batch, tile)
    nact_ref : SMEM (B,) int32              -- # non-padded tiles per batch
    x_hbm    : ANY  (B, n_tiles, n_tokens, D)  -- input, left in HBM
    emb_ref  : VMEM (max_num_tiles**2, D)      -- tanh(gate)-scaled table (resident)
    o_hbm    : ANY  (B, n_tiles, n_tokens, D)  -- output, aliases x's HBM buffer
    buf      : VMEM (2, tq, D)                 -- manual double buffer
    in_sem / out_sem : DMA semaphores, one per buffer slot
    """
    b = pl.program_id(0)
    qoff = pl.multiple_of(pl.program_id(1) * tq, tq)
    n_active = nact_ref[b]

    def in_copy(t, slot):
        return pltpu.make_async_copy(
            x_hbm.at[b, t, pl.ds(qoff, tq), :], buf.at[slot], in_sem.at[slot])

    def out_copy(t, slot):
        return pltpu.make_async_copy(
            buf.at[slot], o_hbm.at[b, t, pl.ds(qoff, tq), :], out_sem.at[slot])

    # Prime the pipeline with the first active tile.
    @pl.when(n_active > 0)
    def _():
        in_copy(0, 0).start()

    def body(t, carry):
        slot = t & 1
        # Input block for tile t is ready.
        in_copy(t, slot).wait()
        # Before reusing the other slot for the next prefetch, drain its
        # pending write-back (tile t-1 went out from slot 1-slot).
        @pl.when(jnp.logical_and(t >= 1, t + 1 < n_active))
        def _():
            out_copy(t - 1, 1 - slot).wait()
        # Prefetch tile t+1 into the other slot.
        @pl.when(t + 1 < n_active)
        def _():
            in_copy(t + 1, 1 - slot).start()
        # Broadcast-add this tile's (pre-scaled) positional row over the block.
        row = rows_ref[b * n_tiles + t]
        buf[slot] = buf[slot] + emb_ref[pl.ds(row, 1), :]
        # Write the updated block back in place.
        out_copy(t, slot).start()
        return carry

    lax.fori_loop(0, n_active, body, 0)

    # Drain the (up to two) write-backs not waited inside the loop.
    @pl.when(n_active >= 2)
    def _():
        out_copy(n_active - 2, (n_active - 2) & 1).wait()

    @pl.when(n_active >= 1)
    def _():
        out_copy(n_active - 1, (n_active - 1) & 1).wait()


def _sublane_pack(dtype) -> int:
    """Second-minor packing: 8 for 4-byte, 16 for 2-byte, 32 for 1-byte dtypes."""
    return max(8, 32 // jnp.dtype(dtype).itemsize)


def _per_buffer_budget_bytes() -> int:
    """Per-slot VMEM budget for the manual double buffer.

    v7x-class parts (<=64 MiB VMEM, ~3.2 TB/s HBM) get 8 MiB slabs so fixed
    per-step/DMA overhead stays negligible; v5e/v6e keep 4 MiB, which already
    sits on their HBM roofline.
    """
    try:
        info = pltpu.get_tpu_info()
        if info.vmem_capacity_bytes <= 64 * 1024 * 1024:
            return 8 * 1024 * 1024
    except Exception:
        pass
    return 4 * 1024 * 1024


def _choose_token_block(n_tokens, embed_dim, dtype, *, min_blocks=1):
    """Token-block size tq: fits the VMEM budget, divides n_tokens (static,
    in-bounds DMA sizes, no ragged tail), prefers a multiple of the dtype's
    sublane packing, and leaves >= min_blocks blocks (megacore split for B==1)."""
    itemsize = jnp.dtype(dtype).itemsize
    pack = _sublane_pack(dtype)
    bytes_per_row = max(1, embed_dim * itemsize)
    tq_max = max(1, _per_buffer_budget_bytes() // bytes_per_row)
    if min_blocks > 1:
        tq_max = min(tq_max, max(1, -(-n_tokens // min_blocks)))
    tq_max = min(tq_max, n_tokens)

    best_any = 1
    for tq in range(tq_max, 0, -1):
        if n_tokens % tq == 0:
            if tq % pack == 0:
                return tq                      # largest pack-aligned divisor
            best_any = max(best_any, tq)       # largest divisor, any alignment
    if best_any >= pack or best_any == n_tokens:
        return best_any
    # No reasonable divisor: fall back to the whole token axis if it still fits
    # comfortably in VMEM; otherwise accept the small block (correct, slower).
    if 2 * n_tokens * bytes_per_row <= 24 * 1024 * 1024:
        return n_tokens
    return best_any


def tile_positional_embedding(x, aspect_ratio, embedding, gate):
    """Pallas wrapper (functional). Prefer `tile_positional_embedding_inplace`
    which donates x so the in-place aliasing avoids a defensive HBM copy.

    x:            (B, n_tiles, n_tokens, D)
    aspect_ratio: (B, 2) int
    embedding:    (max_num_tiles, max_num_tiles, 1, D) float32
    gate:         (1,) float32
    """
    B, n_tiles, n_tokens, D = x.shape
    max_num_tiles = embedding.shape[0]
    assert n_tiles <= max_num_tiles, "n_tiles must be <= max_num_tiles"
    assert embedding.shape == (max_num_tiles, max_num_tiles, 1, D)
    n_rows = max_num_tiles * max_num_tiles

    # Fold tanh(gate) into the tiny table once. NOTE: rounding to x.dtype here
    # differs from an f32-accumulate path by <= 1 ulp for bf16 inputs.
    emb_scaled = (embedding.reshape(n_rows, D).astype(jnp.float32)
                  * jnp.tanh(gate.astype(jnp.float32)[0])).astype(x.dtype)

    ar = aspect_ratio.astype(jnp.int32)
    # Per-(batch, tile) embedding row = (t // w) * max_num_tiles + (t % w),
    # flattened to 1D (avoids 2D SMEM padding). Values for padded tiles are
    # never read: the in-kernel loop stops at n_active.
    t_idx = jnp.arange(n_tiles, dtype=jnp.int32)[None, :]
    w_safe = jnp.maximum(ar[:, 1:2], 1)
    rows = (t_idx // w_safe) * max_num_tiles + (t_idx % w_safe)
    rows = jnp.clip(rows, 0, n_rows - 1).reshape(-1).astype(jnp.int32)
    n_active = jnp.clip(ar[:, 0] * ar[:, 1], 0, n_tiles).astype(jnp.int32)

    min_blocks = 2 if B == 1 else 1            # let both v7x TCs participate
    tq = _choose_token_block(n_tokens, D, x.dtype, min_blocks=min_blocks)
    assert n_tokens % tq == 0
    grid = (B, n_tokens // tq)

    kernel = functools.partial(_tile_pos_embed_kernel, n_tiles=n_tiles, tq=tq)

    itemsize = jnp.dtype(x.dtype).itemsize
    cost = pl.CostEstimate(flops=x.size, transcendentals=0,
                           bytes_accessed=2 * x.size * itemsize)

    return pl.pallas_call(
        kernel,
        out_shape=jax.ShapeDtypeStruct(x.shape, x.dtype),
        grid=grid,
        in_specs=[
            # Row table + active-tile counts: small 1D int32 arrays in SMEM.
            pl.BlockSpec(memory_space=pltpu.MemorySpace.SMEM),
            pl.BlockSpec(memory_space=pltpu.MemorySpace.SMEM),
            # x stays in HBM; the kernel DMAs only the active tiles.
            pl.BlockSpec(memory_space=pl.ANY),
            # Embedding table: full block, constant index map -> VMEM-resident.
            pl.BlockSpec((n_rows, D), lambda b, q: (0, 0)),
        ],
        # Output aliases x in HBM; written by manual DMA, padded tiles untouched.
        out_specs=pl.BlockSpec(memory_space=pl.ANY),
        scratch_shapes=[
            pltpu.VMEM((2, tq, D), x.dtype),       # double buffer
            pltpu.SemaphoreType.DMA((2,)),          # input DMA sems
            pltpu.SemaphoreType.DMA((2,)),          # output DMA sems
        ],
        input_output_aliases={2: 0},               # x (operand 2) -> output 0
        cost_estimate=cost,
        compiler_params=pltpu.CompilerParams(
            dimension_semantics=("parallel", "parallel"),
            vmem_limit_bytes=32 * 1024 * 1024,
        ),
    )(rows, n_active, x, emb_scaled)


# Public entry point: donate x so input_output_aliases={x: out} reuses the
# caller's HBM buffer instead of forcing a hidden defensive copy.
tile_positional_embedding_inplace = jax.jit(
    tile_positional_embedding, donate_argnums=(0,))


def reference_forward(x, aspect_ratio, embedding, gate):
    """Pure-JAX transcription of the PyTorch forward (per-batch python loop)."""
    B, n_tiles, n_tokens, D = x.shape
    g = jnp.tanh(gate.astype(jnp.float32)[0])
    out = []
    for b in range(B):
        h = int(aspect_ratio[b, 0])
        w = int(aspect_ratio[b, 1])
        n = min(h * w, n_tiles)
        pos = embedding[:h, :w, 0, :].reshape(h * w, 1, D)[:n]      # (n, 1, D)
        out.append(x[b].at[:n].add(pos * g))
    return jnp.stack(out, axis=0)


# TODO(synk): _load_state_dict_hook / _resize_position_embedding (bilinear
# interpolation of the table at checkpoint-load time) is host-side state-dict
# machinery, not part of forward; intentionally not implemented as a kernel.

if __name__ == "__main__":
    key = jax.random.PRNGKey(0)

    configs = [
        # (B, n_tiles, n_tokens, D, max_num_tiles, aspect_ratios)
        (2, 4, 16, 128, 4, [[2, 2], [3, 1]]),   # full batch + one padded tile
        (1, 3, 24, 128, 4, [[1, 2]]),           # B==1 multi-token-block path, padded tiles skipped
    ]

    for idx, (B, n_tiles, n_tokens, D, max_num_tiles, ar_list) in enumerate(configs):
        key, k_emb, k_x = jax.random.split(key, 3)
        scale = D ** (-0.5)
        embedding = scale * jax.random.normal(
            k_emb, (max_num_tiles, max_num_tiles, 1, D), dtype=jnp.float32)
        # PyTorch init is zeros(1); use a nonzero value so the tanh(gate)-scaled
        # add path is actually exercised.
        gate = jnp.array([0.5], dtype=jnp.float32)
        x = jax.random.normal(k_x, (B, n_tiles, n_tokens, D), dtype=jnp.float32)
        aspect_ratio = jnp.array(ar_list, dtype=jnp.int32)

        # Compute & materialize the reference before donating x to the kernel.
        ref = jax.block_until_ready(reference_forward(x, aspect_ratio, embedding, gate))

        out = tile_positional_embedding_inplace(x, aspect_ratio, embedding, gate)
        out = jax.block_until_ready(out)
        # x has been donated; it must not be used past this point.

        assert out.shape == ref.shape and out.dtype == ref.dtype
        assert jnp.allclose(out, ref, atol=1e-5, rtol=1e-5), f"config {idx} mismatch"

    print("KERNEL_OK")
</pallas_src>

<mosaic_0001>
module attributes {stable_mosaic.version = 11 : i64} {
  func.func @_tile_pos_embed_kernel(%arg0: i32, %arg1: i32, %arg2: memref<8xi32, #tpu.memory_space<smem>>, %arg3: memref<2xi32, #tpu.memory_space<smem>>, %arg4: memref<2x4x16x128xf32, #tpu.memory_space<any>>, %arg5: memref<16x128xf32, #tpu.memory_space<vmem>>, %arg6: memref<2x4x16x128xf32, #tpu.memory_space<any>>, %arg7: memref<2x16x128xf32, #tpu.memory_space<vmem>>, %arg8: memref<2x!tpu.dma_semaphore, #tpu.memory_space<semaphore_mem>>, %arg9: memref<2x!tpu.dma_semaphore, #tpu.memory_space<semaphore_mem>>) attributes {dimension_semantics = [#tpu.dimension_semantics<parallel>, #tpu.dimension_semantics<parallel>], iteration_bounds = array<i64: 2, 1>, scalar_prefetch = 0 : i64, scratch_operands = 3 : i64, tpu.core_type = #tpu.core_type<tc>, window_params = [{transform_indices = @transform_0, window_bounds = array<i64: 8>}, {transform_indices = @transform_1, window_bounds = array<i64: 2>}, {}, {pipeline_mode = #tpu.pipeline_mode<synchronous>, transform_indices = @transform_3, window_bounds = array<i64: 16, 128>}, {}]} {
    %c16_i32 = arith.constant 16 : i32
    %0 = arith.muli %arg1, %c16_i32 : i32
    %1 = tpu.assume_multiple %0, 16 : i32
    %2 = arith.index_cast %arg0 : i32 to index
    %3 = memref.load %arg3[%2] : memref<2xi32, #tpu.memory_space<smem>>
    %c0_i32 = arith.constant 0 : i32
    %4 = arith.cmpi sgt, %3, %c0_i32 : i32
    %5 = arith.extui %4 : i1 to i32
    %c0_i32_0 = arith.constant 0 : i32
    %6 = arith.cmpi ne, %5, %c0_i32_0 : i32
    scf.if %6 {
      %c0_i32_6 = arith.constant 0 : i32
      %c0_i32_7 = arith.constant 0 : i32
      %c0_i32_8 = arith.constant 0 : i32
      %c0_i32_9 = arith.constant 0 : i32
      %15 = tpu.memref_slice %arg4[%arg0, %c0_i32_6, %1, %c0_i32_9] : memref<2x4x16x128xf32, #tpu.memory_space<any>> -> memref<1x1x16x128xf32, #tpu.memory_space<any>>
      %16 = tpu.memref_squeeze %15 : memref<1x1x16x128xf32, #tpu.memory_space<any>> -> memref<16x128xf32, #tpu.memory_space<any>>
      %c0_i32_10 = arith.constant 0 : i32
      %c0_i32_11 = arith.constant 0 : i32
      %17 = tpu.memref_slice %arg7[%c0_i32_7, %c0_i32_10, %c0_i32_11] : memref<2x16x128xf32, #tpu.memory_space<vmem>> -> memref<1x16x128xf32, #tpu.memory_space<vmem>>
      %18 = tpu.memref_squeeze %17 : memref<1x16x128xf32, #tpu.memory_space<vmem>> -> memref<16x128xf32, #tpu.memory_space<vmem>>
      %19 = tpu.memref_slice %arg8[%c0_i32_8] : memref<2x!tpu.dma_semaphore, #tpu.memory_space<semaphore_mem>> -> memref<1x!tpu.dma_semaphore, #tpu.memory_space<semaphore_mem>>
      %20 = tpu.memref_squeeze %19 : memref<1x!tpu.dma_semaphore, #tpu.memory_space<semaphore_mem>> -> memref<!tpu.dma_semaphore, #tpu.memory_space<semaphore_mem>>
      tpu.enqueue_dma source(%16 : memref<16x128xf32, #tpu.memory_space<any>>) target(%18 : memref<16x128xf32, #tpu.memory_space<vmem>>) target_semaphore(%20 : memref<!tpu.dma_semaphore, #tpu.memory_space<semaphore_mem>>)
    } else {
    }
    %c0_i32_1 = arith.constant 0 : i32
    %c0_i32_2 = arith.constant 0 : i32
    %7 = arith.subi %3, %c0_i32_2 : i32
    %8 = arith.addi %c0_i32_2, %7 : i32
    %c1_i32 = arith.constant 1 : i32
    scf.for %arg10 = %c0_i32_2 to %8 step %c1_i32  : i32 {
      %c1_i32_6 = arith.constant 1 : i32
      %15 = arith.andi %arg10, %c1_i32_6 : i32
      %c0_i32_7 = arith.constant 0 : i32
      %16 = tpu.memref_slice %arg4[%arg0, %arg10, %1, %c0_i32_7] : memref<2x4x16x128xf32, #tpu.memory_space<any>> -> memref<1x1x16x128xf32, #tpu.memory_space<any>>
      %17 = tpu.memref_squeeze %16 : memref<1x1x16x128xf32, #tpu.memory_space<any>> -> memref<16x128xf32, #tpu.memory_space<any>>
      %c0_i32_8 = arith.constant 0 : i32
      %c0_i32_9 = arith.constant 0 : i32
      %18 = tpu.memref_slice %arg7[%15, %c0_i32_8, %c0_i32_9] : memref<2x16x128xf32, #tpu.memory_space<vmem>> -> memref<1x16x128xf32, #tpu.memory_space<vmem>>
      %19 = tpu.memref_squeeze %18 : memref<1x16x128xf32, #tpu.memory_space<vmem>> -> memref<16x128xf32, #tpu.memory_space<vmem>>
      %20 = tpu.memref_slice %arg8[%15] : memref<2x!tpu.dma_semaphore, #tpu.memory_space<semaphore_mem>> -> memref<1x!tpu.dma_semaphore, #tpu.memory_space<semaphore_mem>>
      %21 = tpu.memref_squeeze %20 : memref<1x!tpu.dma_semaphore, #tpu.memory_space<semaphore_mem>> -> memref<!tpu.dma_semaphore, #tpu.memory_space<semaphore_mem>>
      tpu.wait_dma2 semaphore(%21 : memref<!tpu.dma_semaphore, #tpu.memory_space<semaphore_mem>>) src(%17 : memref<16x128xf32, #tpu.memory_space<any>>) dst(%19 : memref<16x128xf32, #tpu.memory_space<vmem>>)
      %c1_i32_10 = arith.constant 1 : i32
      %22 = arith.cmpi sge, %arg10, %c1_i32_10 : i32
      %c1_i32_11 = arith.constant 1 : i32
      %23 = arith.addi %arg10, %c1_i32_11 : i32
      %24 = arith.cmpi slt, %23, %3 : i32
      %25 = arith.andi %22, %24 : i1
      %26 = arith.extui %25 : i1 to i32
      %c0_i32_12 = arith.constant 0 : i32
      %27 = arith.cmpi ne, %26, %c0_i32_12 : i32
      scf.if %27 {
        %c1_i32_22 = arith.constant 1 : i32
        %53 = arith.subi %arg10, %c1_i32_22 : i32
        %c1_i32_23 = arith.constant 1 : i32
        %54 = arith.subi %c1_i32_23, %15 : i32
        %c0_i32_24 = arith.constant 0 : i32
        %c0_i32_25 = arith.constant 0 : i32
        %55 = tpu.memref_slice %arg7[%54, %c0_i32_24, %c0_i32_25] : memref<2x16x128xf32, #tpu.memory_space<vmem>> -> memref<1x16x128xf32, #tpu.memory_space<vmem>>
        %56 = tpu.memref_squeeze %55 : memref<1x16x128xf32, #tpu.memory_space<vmem>> -> memref<16x128xf32, #tpu.memory_space<vmem>>
        %c0_i32_26 = arith.constant 0 : i32
        %57 = tpu.memref_slice %arg6[%arg0, %53, %1, %c0_i32_26] : memref<2x4x16x128xf32, #tpu.memory_space<any>> -> memref<1x1x16x128xf32, #tpu.memory_space<any>>
        %58 = tpu.memref_squeeze %57 : memref<1x1x16x128xf32, #tpu.memory_space<any>> -> memref<16x128xf32, #tpu.memory_space<any>>
        %59 = tpu.memref_slice %arg9[%54] : memref<2x!tpu.dma_semaphore, #tpu.memory_space<semaphore_mem>> -> memref<1x!tpu.dma_semaphore, #tpu.memory_space<semaphore_mem>>
        %60 = tpu.memref_squeeze %59 : memref<1x!tpu.dma_semaphore, #tpu.memory_space<semaphore_mem>> -> memref<!tpu.dma_semaphore, #tpu.memory_space<semaphore_mem>>
        tpu.wait_dma2 semaphore(%60 : memref<!tpu.dma_semaphore, #tpu.memory_space<semaphore_mem>>) src(%56 : memref<16x128xf32, #tpu.memory_space<vmem>>) dst(%58 : memref<16x128xf32, #tpu.memory_space<any>>)
      } else {
      }
      %c1_i32_13 = arith.constant 1 : i32
      %28 = arith.addi %arg10, %c1_i32_13 : i32
      %29 = arith.cmpi slt, %28, %3 : i32
      %30 = arith.extui %29 : i1 to i32
      %c0_i32_14 = arith.constant 0 : i32
      %31 = arith.cmpi ne, %30, %c0_i32_14 : i32
      scf.if %31 {
        %c1_i32_22 = arith.constant 1 : i32
        %53 = arith.addi %arg10, %c1_i32_22 : i32
        %c1_i32_23 = arith.constant 1 : i32
        %54 = arith.subi %c1_i32_23, %15 : i32
        %c0_i32_24 = arith.constant 0 : i32
        %55 = tpu.memref_slice %arg4[%arg0, %53, %1, %c0_i32_24] : memref<2x4x16x128xf32, #tpu.memory_space<any>> -> memref<1x1x16x128xf32, #tpu.memory_space<any>>
        %56 = tpu.memref_squeeze %55 : memref<1x1x16x128xf32, #tpu.memory_space<any>> -> memref<16x128xf32, #tpu.memory_space<any>>
        %c0_i32_25 = arith.constant 0 : i32
        %c0_i32_26 = arith.constant 0 : i32
        %57 = tpu.memref_slice %arg7[%54, %c0_i32_25, %c0_i32_26] : memref<2x16x128xf32, #tpu.memory_space<vmem>> -> memref<1x16x128xf32, #tpu.memory_space<vmem>>
        %58 = tpu.memref_squeeze %57 : memref<1x16x128xf32, #tpu.memory_space<vmem>> -> memref<16x128xf32, #tpu.memory_space<vmem>>
        %59 = tpu.memref_slice %arg8[%54] : memref<2x!tpu.dma_semaphore, #tpu.memory_space<semaphore_mem>> -> memref<1x!tpu.dma_semaphore, #tpu.memory_space<semaphore_mem>>
        %60 = tpu.memref_squeeze %59 : memref<1x!tpu.dma_semaphore, #tpu.memory_space<semaphore_mem>> -> memref<!tpu.dma_semaphore, #tpu.memory_space<semaphore_mem>>
        tpu.enqueue_dma source(%56 : memref<16x128xf32, #tpu.memory_space<any>>) target(%58 : memref<16x128xf32, #tpu.memory_space<vmem>>) target_semaphore(%60 : memref<!tpu.dma_semaphore, #tpu.memory_space<semaphore_mem>>)
      } else {
      }
      %c4_i32 = arith.constant 4 : i32
      %32 = arith.muli %arg0, %c4_i32 : i32
      %33 = arith.addi %32, %arg10 : i32
      %34 = arith.index_cast %33 : i32 to index
      %35 = memref.load %arg2[%34] : memref<8xi32, #tpu.memory_space<smem>>
      %36 = arith.index_cast %15 : i32 to index
      %c0 = arith.constant 0 : index
      %c0_15 = arith.constant 0 : index
      %37 = vector.load %arg7[%36, %c0, %c0_15] : memref<2x16x128xf32, #tpu.memory_space<vmem>>, vector<1x16x128xf32>
      %38 = vector.shape_cast %37 : vector<1x16x128xf32> to vector<16x128xf32>
      %39 = arith.index_cast %35 : i32 to index
      %c0_16 = arith.constant 0 : index
      %40 = vector.load %arg5[%39, %c0_16] : memref<16x128xf32, #tpu.memory_space<vmem>>, vector<1x128xf32>
      %41 = vector.broadcast %40 : vector<1x128xf32> to vector<16x128xf32>
      %42 = arith.addf %38, %41 : vector<16x128xf32>
      %43 = arith.index_cast %15 : i32 to index
      %c0_17 = arith.constant 0 : index
      %c0_18 = arith.constant 0 : index
      %44 = vector.load %arg7[%43, %c0_17, %c0_18] : memref<2x16x128xf32, #tpu.memory_space<vmem>>, vector<1x16x128xf32>
      %45 = vector.shape_cast %44 : vector<1x16x128xf32> to vector<16x128xf32>
      %46 = vector.shape_cast %42 : vector<16x128xf32> to vector<1x16x128xf32>
      tpu.vector_store %arg7[%43, %c0_17, %c0_18], %46 {strides = array<i32>} : memref<2x16x128xf32, #tpu.memory_space<vmem>>, vector<1x16x128xf32>,
      %c0_i32_19 = arith.constant 0 : i32
      %c0_i32_20 = arith.constant 0 : i32
      %47 = tpu.memref_slice %arg7[%15, %c0_i32_19, %c0_i32_20] : memref<2x16x128xf32, #tpu.memory_space<vmem>> -> memref<1x16x128xf32, #tpu.memory_space<vmem>>
      %48 = tpu.memref_squeeze %47 : memref<1x16x128xf32, #tpu.memory_space<vmem>> -> memref<16x128xf32, #tpu.memory_space<vmem>>
      %c0_i32_21 = arith.constant 0 : i32
      %49 = tpu.memref_slice %arg6[%arg0, %arg10, %1, %c0_i32_21] : memref<2x4x16x128xf32, #tpu.memory_space<any>> -> memref<1x1x16x128xf32, #tpu.memory_space<any>>
      %50 = tpu.memref_squeeze %49 : memref<1x1x16x128xf32, #tpu.memory_space<any>> -> memref<16x128xf32, #tpu.memory_space<any>>
      %51 = tpu.memref_slice %arg9[%15] : memref<2x!tpu.dma_semaphore, #tpu.memory_space<semaphore_mem>> -> memref<1x!tpu.dma_semaphore, #tpu.memory_space<semaphore_mem>>
      %52 = tpu.memref_squeeze %51 : memref<1x!tpu.dma_semaphore, #tpu.memory_space<semaphore_mem>> -> memref<!tpu.dma_semaphore, #tpu.memory_space<semaphore_mem>>
      tpu.enqueue_dma source(%48 : memref<16x128xf32, #tpu.memory_space<vmem>>) target(%50 : memref<16x128xf32, #tpu.memory_space<any>>) target_semaphore(%52 : memref<!tpu.dma_semaphore, #tpu.memory_space<semaphore_mem>>)
    }
    %c2_i32 = arith.constant 2 : i32
    %9 = arith.cmpi sge, %3, %c2_i32 : i32
    %10 = arith.extui %9 : i1 to i32
    %c0_i32_3 = arith.constant 0 : i32
    %11 = arith.cmpi ne, %10, %c0_i32_3 : i32
    scf.if %11 {
      %c2_i32_6 = arith.constant 2 : i32
      %15 = arith.subi %3, %c2_i32_6 : i32
      %c2_i32_7 = arith.constant 2 : i32
      %16 = arith.subi %3, %c2_i32_7 : i32
      %c1_i32_8 = arith.constant 1 : i32
      %17 = arith.andi %16, %c1_i32_8 : i32
      %c0_i32_9 = arith.constant 0 : i32
      %c0_i32_10 = arith.constant 0 : i32
      %18 = tpu.memref_slice %arg7[%17, %c0_i32_9, %c0_i32_10] : memref<2x16x128xf32, #tpu.memory_space<vmem>> -> memref<1x16x128xf32, #tpu.memory_space<vmem>>
      %19 = tpu.memref_squeeze %18 : memref<1x16x128xf32, #tpu.memory_space<vmem>> -> memref<16x128xf32, #tpu.memory_space<vmem>>
      %c0_i32_11 = arith.constant 0 : i32
      %20 = tpu.memref_slice %arg6[%arg0, %15, %1, %c0_i32_11] : memref<2x4x16x128xf32, #tpu.memory_space<any>> -> memref<1x1x16x128xf32, #tpu.memory_space<any>>
      %21 = tpu.memref_squeeze %20 : memref<1x1x16x128xf32, #tpu.memory_space<any>> -> memref<16x128xf32, #tpu.memory_space<any>>
      %22 = tpu.memref_slice %arg9[%17] : memref<2x!tpu.dma_semaphore, #tpu.memory_space<semaphore_mem>> -> memref<1x!tpu.dma_semaphore, #tpu.memory_space<semaphore_mem>>
      %23 = tpu.memref_squeeze %22 : memref<1x!tpu.dma_semaphore, #tpu.memory_space<semaphore_mem>> -> memref<!tpu.dma_semaphore, #tpu.memory_space<semaphore_mem>>
      tpu.wait_dma2 semaphore(%23 : memref<!tpu.dma_semaphore, #tpu.memory_space<semaphore_mem>>) src(%19 : memref<16x128xf32, #tpu.memory_space<vmem>>) dst(%21 : memref<16x128xf32, #tpu.memory_space<any>>)
    } else {
    }
    %c1_i32_4 = arith.constant 1 : i32
    %12 = arith.cmpi sge, %3, %c1_i32_4 : i32
    %13 = arith.extui %12 : i1 to i32
    %c0_i32_5 = arith.constant 0 : i32
    %14 = arith.cmpi ne, %13, %c0_i32_5 : i32
    scf.if %14 {
      %c1_i32_6 = arith.constant 1 : i32
      %15 = arith.subi %3, %c1_i32_6 : i32
      %c1_i32_7 = arith.constant 1 : i32
      %16 = arith.subi %3, %c1_i32_7 : i32
      %c1_i32_8 = arith.constant 1 : i32
      %17 = arith.andi %16, %c1_i32_8 : i32
      %c0_i32_9 = arith.constant 0 : i32
      %c0_i32_10 = arith.constant 0 : i32
      %18 = tpu.memref_slice %arg7[%17, %c0_i32_9, %c0_i32_10] : memref<2x16x128xf32, #tpu.memory_space<vmem>> -> memref<1x16x128xf32, #tpu.memory_space<vmem>>
      %19 = tpu.memref_squeeze %18 : memref<1x16x128xf32, #tpu.memory_space<vmem>> -> memref<16x128xf32, #tpu.memory_space<vmem>>
      %c0_i32_11 = arith.constant 0 : i32
      %20 = tpu.memref_slice %arg6[%arg0, %15, %1, %c0_i32_11] : memref<2x4x16x128xf32, #tpu.memory_space<any>> -> memref<1x1x16x128xf32, #tpu.memory_space<any>>
      %21 = tpu.memref_squeeze %20 : memref<1x1x16x128xf32, #tpu.memory_space<any>> -> memref<16x128xf32, #tpu.memory_space<any>>
      %22 = tpu.memref_slice %arg9[%17] : memref<2x!tpu.dma_semaphore, #tpu.memory_space<semaphore_mem>> -> memref<1x!tpu.dma_semaphore, #tpu.memory_space<semaphore_mem>>
      %23 = tpu.memref_squeeze %22 : memref<1x!tpu.dma_semaphore, #tpu.memory_space<semaphore_mem>> -> memref<!tpu.dma_semaphore, #tpu.memory_space<semaphore_mem>>
      tpu.wait_dma2 semaphore(%23 : memref<!tpu.dma_semaphore, #tpu.memory_space<semaphore_mem>>) src(%19 : memref<16x128xf32, #tpu.memory_space<vmem>>) dst(%21 : memref<16x128xf32, #tpu.memory_space<any>>)
    } else {
    }
    return
  }
  func.func @transform_0(%arg0: i32, %arg1: i32) -> i32 {
    %c0_i32 = arith.constant 0 : i32
    %c0_i32_0 = arith.constant 0 : i32
    return %c0_i32 : i32
  }
  func.func @transform_1(%arg0: i32, %arg1: i32) -> i32 {
    %c0_i32 = arith.constant 0 : i32
    %c0_i32_0 = arith.constant 0 : i32
    return %c0_i32 : i32
  }
  func.func @transform_3(%arg0: i32, %arg1: i32) -> (i32, i32) {
    %c0_i32 = arith.constant 0 : i32
    %c0_i32_0 = arith.constant 0 : i32
    %c0_i32_1 = arith.constant 0 : i32
    return %c0_i32, %c0_i32_0 : i32, i32
  }
}

</mosaic_0001>

<llo_original>
// kernel: tile_positional_embedding.1
$region0: #{tile_positional_embedding.1}
  #allocation0 [shape = 'u32[]', space=smem, size = 0x4, offset = 0x4, fixed_abs, tag = 'smem constant byte address 0x4 - core index']
  #allocation1 [shape = 'u32[72,128]{1,0:T(1,128)}', space=vmem, size = 0x9000, scoped, tag = 'internal scratch']
  #allocation2 [shape = 'f32[2,16,128]{2,1,0:T(8,128)}', space=vmem, size = 0x4000, scoped, tag = 'scratch operand']
  #allocation3 [shape = 's32[2]{0}', space=sflag, size = 0x8, scoped, tag = 'scratch operand']
  #allocation4 [shape = 's32[2]{0}', space=sflag, size = 0x8, scoped, tag = 'scratch operand']
  #allocation9 [shape = 's32[]', space=sflag, size = 0x4, offset = 0, fixed_abs, tag = 'sflag constant byte address 0x0 - dummy sync flag']
  #allocation10 [shape = 's32[]', space=sflag, size = 0x4, offset = 0, fixed_abs, tag = 'sflag constant byte address 0x0 - dummy sync flag']
  #allocation11 [shape = 'u32[]', space=smem, size = 0x4, offset = 0x44, fixed_abs, tag = 'smem constant byte address 0x44 - assertion arg 0']
  #allocation12 [shape = 'u32[]', space=smem, size = 0x4, offset = 0x48, fixed_abs, tag = 'smem constant byte address 0x48 - assertion arg 1']
  #allocation13 [shape = 's32[]', space=sflag, size = 0x4, offset = 0, fixed_abs, tag = 'sflag constant byte address 0x0 - dummy sync flag']
  #allocation14 [shape = 's32[]', space=sflag, size = 0x4, offset = 0, fixed_abs, tag = 'sflag constant byte address 0x0 - dummy sync flag']
  #allocation15 [shape = 's32[]', space=sflag, size = 0x4, offset = 0, fixed_abs, tag = 'sflag constant byte address 0x0 - dummy sync flag']
  #allocation16 [shape = 's32[]', space=sflag, size = 0x4, offset = 0, fixed_abs, tag = 'sflag constant byte address 0x0 - dummy sync flag']
  %s0 = inlined_call_operand.vmem [shape: s32[8], index: 0, kind: input, shape index: {}]
  %s1 = inlined_call_operand.vmem [shape: s32[2], index: 1, kind: input, shape index: {}]
  %s2 = inlined_call_operand.hbm [shape: f32[2,4,16,128], index: 2, kind: input, shape index: {}, may-alias: {2,4}]
  %s3 = inlined_call_operand.vmem [shape: f32[16,128], index: 3, kind: input, shape index: {}]
  %s4 = inlined_call_operand.hbm [shape: f32[2,4,16,128], index: 4, kind: output, shape index: {}, may-alias: {2,4}]
  %s5 = sld [smem:[#allocation0]]
  $region80: #{tile_positional_embedding.1} parent=0
    _
  %s7 = ssub.s32 1, %s5
  %s8 = scalar_select 0, %s7, %s5
  $region1: #{tile_positional_embedding.1} parent=0
    #allocation5 [shape = 'u8[512]{0}', space=smem, size = 0x200, scoped, tag = 'input window, operand 0, single buffered']
    #allocation6 [shape = 's32[2]{0}', space=sflag, size = 0x8, scoped, tag = 'scoped memory for tile_positional_embedding.1']
    #allocation7 [shape = 'u8[512]{0}', space=smem, size = 0x200, scoped, tag = 'input window, operand 1, single buffered']
    #allocation8 [shape = 's32[1]{0}', space=sflag, size = 0x4, scoped, tag = 'scoped memory for tile_positional_embedding.1']
    %9 = vsyncpa [#allocation6], 0
    %10 = vsyncpa [#allocation8], 0
    loop: start=0, step=1, limit=3
    $region2: #{tile_positional_embedding.1} parent=1 // loop_pre_header
      _
    $region3: #{tile_positional_embedding.1} parent=1 // loop_header
      %s12 = sphi 0, %s16
      %p13 = scmp.ge.s32.totalorder %s12, 3
      %s18 = sphi 0, %s28
      %s19 = sphi 0, %s24
      %s20 = sphi 0, %s18
      %s21 = sphi 0, %s19
      %s29 = sphi 0, %s29
      %s31 = sphi 0, %s29
      %s39 = sphi 0, %s31
      %s43 = sphi 0, %s43
      %s45 = sphi 0, %s43
      %s53 = sphi 0, %s45
      %s57 = sphi 0, %s57
      %s59 = sphi 0, %s57
      %s67 = sphi 0, %s59
    $region4: #{tile_positional_embedding.1} parent=1 // loop_header_branch
      %15 = sbr.rel (%p13) target = $region8
    $region5: #{tile_positional_embedding.1} parent=1 // loop_body
      %s17 = ssub.s32 %s12, 1
      %s22 = sadd.s32 1, %s19
      %p23 = scmp.ge.s32.totalorder %s22, 1
      %s24 = scalar_select %p23, 0, %s22
      %s25 = sadd.s32 1, %s18
      %s26 = scalar_select %p23, %s25, %s18
      %p27 = scmp.ge.s32.totalorder %s26, 2
      %s28 = scalar_select %p27, 0, %s26
      %s30 = sadd.s32 %s29, 1
      %p32 = scmp.eq.s32.totalorder %s12, 1
      %p33 = scmp.ne.s32.totalorder %s29, %s31
      %p34 = scmp.eq.s32.totalorder %s12, 0
      %p35 = por %p33, %p34
      %p36 = scmp.ne.s32.totalorder %s29, %s31
      %p37 = scmp.eq.s32.totalorder %s17, 1
      %p38 = por %p36, %p37
      %p40 = scmp.ne.s32.totalorder %s31, %s39
      %p41 = scmp.eq.s32.totalorder %s17, 0
      %p42 = por %p40, %p41
      %s44 = sadd.s32 %s43, 1
      %p46 = scmp.eq.s32.totalorder %s12, 1
      %p47 = scmp.ne.s32.totalorder %s43, %s45
      %p48 = scmp.eq.s32.totalorder %s12, 0
      %p49 = por %p47, %p48
      %p50 = scmp.ne.s32.totalorder %s43, %s45
      %p51 = scmp.eq.s32.totalorder %s17, 1
      %p52 = por %p50, %p51
      %p54 = scmp.ne.s32.totalorder %s45, %s53
      %p55 = scmp.eq.s32.totalorder %s17, 0
      %p56 = por %p54, %p55
      %s58 = sadd.s32 %s57, 1
      %p60 = scmp.eq.s32.totalorder %s12, 1
      %p61 = scmp.ne.s32.totalorder %s57, %s59
      %p62 = scmp.eq.s32.totalorder %s12, 0
      %p63 = por %p61, %p62
      %p64 = scmp.ne.s32.totalorder %s57, %s59
      %p65 = scmp.eq.s32.totalorder %s17, 1
      %p66 = por %p64, %p65
      %p68 = scmp.ne.s32.totalorder %s59, %s67
      %p69 = scmp.eq.s32.totalorder %s17, 0
      %p70 = por %p68, %p69
      %p71 = scmp.le.s32.totalorder 1, %s12
      // Predicated region
      $region9: #{tile_positional_embedding.1} parent=5 // pred_check
        %p72 = pneg %p71
      $region10: #{tile_positional_embedding.1} parent=5 // pred_check_branch
        %74 = sbr.rel (%p72) target = $region12
      $region11: #{tile_positional_embedding.1} parent=5 // pred_region
        %s75 = ssub.s32 %s12, 1
        // Predicated region
        $region13: #{tile_positional_embedding.1} parent=11 // pred_check
          %p76 = pneg %p42
        $region14: #{tile_positional_embedding.1} parent=11 // pred_check_branch
          %78 = sbr.rel (%p76) target = $region16
        $region15: #{tile_positional_embedding.1} parent=11 // pred_region
          %80 = vsyncadd [#allocation6], 0
          %s82 = sshll.u32 %s0, 4
          %s83 = int_to_ptr.vmem [resolvable:$true] %s82
          %85 = dma.vmem_to_smem %s83, 16, [#allocation5], [#allocation6]
        $region16: #{tile_positional_embedding.1} parent=11 // pred_fallthru
          _
        // Predicated region
        $region17: #{tile_positional_embedding.1} parent=11 // pred_check
          %p86 = pneg %p56
        $region18: #{tile_positional_embedding.1} parent=11 // pred_check_branch
          %88 = sbr.rel (%p86) target = $region20
        $region19: #{tile_positional_embedding.1} parent=11 // pred_region
          %90 = vsyncadd [#allocation8], 0
          %s92 = sshll.u32 %s1, 4
          %s93 = int_to_ptr.vmem [resolvable:$true] %s92
          %95 = dma.vmem_to_smem %s93, 16, [#allocation7], [#allocation8]
        $region20: #{tile_positional_embedding.1} parent=11 // pred_fallthru
          _
        // Predicated region
        $region21: #{tile_positional_embedding.1} parent=11 // pred_check
          %p96 = pneg %p70
        $region22: #{tile_positional_embedding.1} parent=11 // pred_check_branch
          %98 = sbr.rel (%p96) target = $region24
        $region23: #{tile_positional_embedding.1} parent=11 // pred_region
          _
        $region24: #{tile_positional_embedding.1} parent=11 // pred_fallthru
          _
      $region12: #{tile_positional_embedding.1} parent=5 // pred_fallthru
        _
      %p99 = scmp.lt.s32.totalorder %s12, 2
      // Predicated region
      $region25: #{tile_positional_embedding.1} parent=5 // pred_check
        %p100 = pneg %p99
      $region26: #{tile_positional_embedding.1} parent=5 // pred_check_branch
        %102 = sbr.rel (%p100) target = $region28
      $region27: #{tile_positional_embedding.1} parent=5 // pred_region
        _
      $region28: #{tile_positional_embedding.1} parent=5 // pred_fallthru
        _
      %p103 = scmp.le.s32.totalorder 1, %s12
      // Predicated region
      $region29: #{tile_positional_embedding.1} parent=5 // pred_check
        %p104 = pneg %p103
      $region30: #{tile_positional_embedding.1} parent=5 // pred_check_branch
        %106 = sbr.rel (%p104) target = $region32
      $region31: #{tile_positional_embedding.1} parent=5 // pred_region
        %s107 = ssub.s32 %s12, 1
        // Predicated region
        $region33: #{tile_positional_embedding.1} parent=31 // pred_check
          %p108 = pneg %p42
        $region34: #{tile_positional_embedding.1} parent=31 // pred_check_branch
          %110 = sbr.rel (%p108) target = $region36
        $region35: #{tile_positional_embedding.1} parent=31 // pred_region
          %112 = dma.done [#allocation6], 16
        $region36: #{tile_positional_embedding.1} parent=31 // pred_fallthru
          _
        // Predicated region
        $region37: #{tile_positional_embedding.1} parent=31 // pred_check
          %p113 = pneg %p56
        $region38: #{tile_positional_embedding.1} parent=31 // pred_check_branch
          %115 = sbr.rel (%p113) target = $region40
        $region39: #{tile_positional_embedding.1} parent=31 // pred_region
          %117 = dma.done [#allocation8], 16
        $region40: #{tile_positional_embedding.1} parent=31 // pred_fallthru
          _
        %118 = sfence
        %p119 = pneg %p42
        %p120 = pneg %p38
        %p121 = pneg %p56
        %p122 = pneg %p52
        %p123 = pneg %p70
        %p124 = pneg %p66
        %s125 = smul.u32 %s21, 16
        %s126 = sld [smem:[#allocation7 + %s20]]
        %p127 = scmp.gt.s32.totalorder %s126, 0
        // Predicated region
        $region41: #{tile_positional_embedding.1} parent=31 // pred_check
          %p128 = pneg %p127
        $region42: #{tile_positional_embedding.1} parent=31 // pred_check_branch
          %130 = sbr.rel (%p128) target = $region44
        $region43: #{tile_positional_embedding.1} parent=31 // pred_region
          %s131 = smul.u32 %s20, 64
          %s132 = sadd.s32 %s125, %s131
          %s133 = scalar_lea.hbm %s2, %s132
          // Predicated region
          $region45: #{tile_positional_embedding.1} parent=43 // pred_check
            _
          $region46: #{tile_positional_embedding.1} parent=43 // pred_check_branch
            %135 = sbr.rel target = $region48
          $region47: #{tile_positional_embedding.1} parent=43 // pred_region
            %136 = sst [smem:[#allocation11]] [#allocation10]
            %137 = sst [smem:[#allocation12]] [#allocation9]
          $region48: #{tile_positional_embedding.1} parent=43 // pred_fallthru
            _
          %139 = shalt.err (0)
          %s141 = sshll.u32 %s133, 4
          %s142 = int_to_ptr.hbm [resolvable:$true] %s141
          %s143 = sshll.u32 [#allocation2], 4
          %s144 = int_to_ptr.vmem [resolvable:$true] %s143
          %146 = dma.hbm_to_vmem [thread:$0]  %s142, 256, %s144, [#allocation3]
        $region44: #{tile_positional_embedding.1} parent=31 // pred_fallthru
          _
        // While loop
        $region49: #{tile_positional_embedding.1} parent=31 // loop_pre_header
          _
        $region50: #{tile_positional_embedding.1} parent=31 // loop_header
          %s148 = sphi 0, %s150
          %p149 = scmp.ge.s32.totalorder %s148, %s126
        $region51: #{tile_positional_embedding.1} parent=31 // loop_header_branch
          %152 = sbr.rel (%p149) target = $region55
        $region52: #{tile_positional_embedding.1} parent=31 // loop_body
          %s153 = sand.u32 %s148, 1
          %s154 = smul.u32 %s153, 16
          %s155 = scalar_lea.vmem [#allocation2], %s154
          %s156 = scalar_lea.sflag [#allocation3], %s153
          %s157 = smul.u32 16, 1
          %s158 = sshll.u32 %s157, 4
          %159 = dma.done %s156, %s158
          %p160 = scmp.ge.s32.totalorder %s148, 1
          %s161 = sadd.s32 %s148, 1
          %p162 = scmp.lt.s32.totalorder %s161, %s126
          %p163 = pnand %p160, %p162
          %p164 = pneg %p163
          // Predicated region
          $region56: #{tile_positional_embedding.1} parent=52 // pred_check
            _
          $region57: #{tile_positional_embedding.1} parent=52 // pred_check_branch
            %166 = sbr.rel (%p163) target = $region59
          $region58: #{tile_positional_embedding.1} parent=52 // pred_region
            %s167 = ssub.s32 1, %s153
            %s168 = scalar_lea.sflag [#allocation4], %s167
            %s169 = sshll.u32 %s157, 4
            %170 = dma.done %s168, %s169
          $region59: #{tile_positional_embedding.1} parent=52 // pred_fallthru
            _
          // Predicated region
          $region60: #{tile_positional_embedding.1} parent=52 // pred_check
            %p171 = pneg %p162
          $region61: #{tile_positional_embedding.1} parent=52 // pred_check_branch
            %173 = sbr.rel (%p171) target = $region63
          $region62: #{tile_positional_embedding.1} parent=52 // pred_region
            %s174 = ssub.s32 1, %s153
            %s175 = smul.u32 %s161, 16
            %s176 = sadd.s32 %s125, %s175
            %s177 = smul.u32 %s20, 64
            %s178 = sadd.s32 %s176, %s177
            %s179 = scalar_lea.hbm %s2, %s178
            %s180 = smul.u32 %s174, 16
            %s181 = scalar_lea.vmem [#allocation2], %s180
            %s182 = scalar_lea.sflag [#allocation3], %s174
            // Predicated region
            $region64: #{tile_positional_embedding.1} parent=62 // pred_check
              _
            $region65: #{tile_positional_embedding.1} parent=62 // pred_check_branch
              %184 = sbr.rel target = $region67
            $region66: #{tile_positional_embedding.1} parent=62 // pred_region
              %185 = sst [smem:[#allocation11]] [#allocation14]
              %186 = sst [smem:[#allocation12]] [#allocation13]
            $region67: #{tile_positional_embedding.1} parent=62 // pred_fallthru
              _
            %188 = shalt.err (0)
            %s190 = sshll.u32 %s179, 4
            %s191 = int_to_ptr.hbm [resolvable:$true] %s190
            %s192 = sshll.u32 %s181, 4
            %s193 = int_to_ptr.vmem [resolvable:$true] %s192
            %195 = dma.hbm_to_vmem [thread:$0]  %s191, 256, %s193, %s182
          $region63: #{tile_positional_embedding.1} parent=52 // pred_fallthru
            _
          %s196 = smul.u32 %s20, 4
          %s197 = sadd.s32 %s196, %s148
          %s198 = sld [smem:[#allocation5 + %s197]]
          %v199 = vld [vmem:[%s155] sm:$0xff]
          %v200 = vld [vmem:[%s155 + $0x8] sm:$0xff]
          %s201 = scalar_lea.vmem %s3, %s198
          %v202 = vld [vmem:[%s201] sm:$0x1]
          %v203 = vperm.slane %v202, 0
          %v204 = vadd.f32 %v199, %v203
          %v205 = vadd.f32 %v200, %v203
          %206 = vst [vmem:[%s155] sm:$0xff] %v204
          %207 = vst [vmem:[%s155 + $0x8] sm:$0xff] %v205
          %s208 = smul.u32 %s148, 16
          %s209 = sadd.s32 %s125, %s208
          %s210 = smul.u32 %s20, 64
          %s211 = sadd.s32 %s209, %s210
          %s212 = scalar_lea.hbm %s4, %s211
          %s213 = scalar_lea.sflag [#allocation4], %s153
          // Predicated region
          $region68: #{tile_positional_embedding.1} parent=52 // pred_check
            _
          $region69: #{tile_positional_embedding.1} parent=52 // pred_check_branch
            %215 = sbr.rel target = $region71
          $region70: #{tile_positional_embedding.1} parent=52 // pred_region
            %216 = sst [smem:[#allocation11]] [#allocation16]
            %217 = sst [smem:[#allocation12]] [#allocation15]
          $region71: #{tile_positional_embedding.1} parent=52 // pred_fallthru
            _
          %219 = shalt.err (0)
          %s221 = sshll.u32 %s155, 4
          %s222 = int_to_ptr.vmem [resolvable:$true] %s221
          %s223 = sshll.u32 %s212, 4
          %s224 = int_to_ptr.hbm [resolvable:$true] %s223
          %226 = dma.vmem_to_hbm [thread:$0]  %s222, 256, %s224, %s213
        $region53: #{tile_positional_embedding.1} parent=31 // loop_footer
          %s150 = sadd.s32 %s148, 1
        $region54: #{tile_positional_embedding.1} parent=31 // loop_footer_branch
          %147 = sbr.rel target = $region50
        $region55: #{tile_positional_embedding.1} parent=31 // loop_exit
          _
        %p227 = scmp.ge.s32.totalorder %s126, 2
        // Predicated region
        $region72: #{tile_positional_embedding.1} parent=31 // pred_check
          %p228 = pneg %p227
        $region73: #{tile_positional_embedding.1} parent=31 // pred_check_branch
          %230 = sbr.rel (%p228) target = $region75
        $region74: #{tile_positional_embedding.1} parent=31 // pred_region
          %s231 = ssub.s32 %s126, 2
          %s232 = sand.u32 %s231, 1
          %s233 = scalar_lea.sflag [#allocation4], %s232
          %s234 = smul.u32 16, 1
          %s235 = sshll.u32 %s234, 4
          %236 = dma.done %s233, %s235
        $region75: #{tile_positional_embedding.1} parent=31 // pred_fallthru
          _
        %p237 = scmp.ge.s32.totalorder %s126, 1
        // Predicated region
        $region76: #{tile_positional_embedding.1} parent=31 // pred_check
          %p238 = pneg %p237
        $region77: #{tile_positional_embedding.1} parent=31 // pred_check_branch
          %240 = sbr.rel (%p238) target = $region79
        $region78: #{tile_positional_embedding.1} parent=31 // pred_region
          %s241 = ssub.s32 %s126, 1
          %s242 = sand.u32 %s241, 1
          %s243 = scalar_lea.sflag [#allocation4], %s242
          %s244 = smul.u32 16, 1
          %s245 = sshll.u32 %s244, 4
          %246 = dma.done %s243, %s245
        $region79: #{tile_positional_embedding.1} parent=31 // pred_fallthru
          _
      $region32: #{tile_positional_embedding.1} parent=5 // pred_fallthru
        _
    $region6: #{tile_positional_embedding.1} parent=1 // loop_footer
      %s16 = sadd.s32 1, %s12
    $region7: #{tile_positional_embedding.1} parent=1 // loop_footer_branch
      %11 = sbr.rel target = $region3
    $region8: #{tile_positional_embedding.1} parent=1 // loop_exit
      _
    %247 = vsyncpa [#allocation6], 1
    %s248 = scalar_lea.sflag [#allocation6], 1
    %249 = vsyncpa %s248, 1
    %250 = vsyncpa [#allocation8], 1
  %251 = vsyncmov [#allocation3]
  %s252 = vpop.sfrf %251
  %p253 = scmp.eq.s32.totalorder %s252, 0
  %p254 = pneg %p253
  %256 = shalt.err (%p254)
  %s257 = scalar_lea.sflag [#allocation3], 1
  %258 = vsyncmov %s257
  %s259 = vpop.sfrf %258
  %p260 = scmp.eq.s32.totalorder %s259, 0
  %p261 = pneg %p260
  %263 = shalt.err (%p261)
  %264 = vsyncmov [#allocation4]
  %s265 = vpop.sfrf %264
  %p266 = scmp.eq.s32.totalorder %s265, 0
  %p267 = pneg %p266
  %269 = shalt.err (%p267)
  %s270 = scalar_lea.sflag [#allocation4], 1
  %271 = vsyncmov %s270
  %s272 = vpop.sfrf %271
  %p273 = scmp.eq.s32.totalorder %s272, 0
  %p274 = pneg %p273
  %276 = shalt.err (%p274)

</llo_original>
